<compile_context>
chip_gen: v7x
topology: tpu7x:2x2x1
jax: 0.10.0
libtpu: 0.0.40
codegen_flags: <defaults>
</compile_context>

<pallas_src>
import functools

import jax
import jax.numpy as jnp
from jax.experimental import pallas as pl
from jax.experimental.pallas import tpu as pltpu


def _rmsnorm_kernel(x_ref, w_ref, o_ref, *, eps):
    # x_ref: (TR, H) tile of rows; w_ref: (1, H) weight broadcast over rows.
    x_in = x_ref[...]
    x = x_in.astype(jnp.float32)                    # hidden_states.to(float32)
    var = jnp.mean(x * x, axis=-1, keepdims=True)   # pow(2).mean(-1, keepdim=True)
    inv = jax.lax.rsqrt(var + eps)                  # rsqrt(variance + eps)
    normed = (x * inv).astype(x_in.dtype)           # .to(input_dtype) (bit-match PyTorch)
    # weight * normed promotes once via JAX type promotion; no extra round-trips.
    o_ref[...] = (w_ref[...] * normed).astype(o_ref.dtype)


def _sublane_multiple(dtype):
    # Native sublane packing: 8 rows for 32-bit, 16 for 16-bit, 32 for 8-bit.
    itemsize = jnp.dtype(dtype).itemsize
    return max(8, 32 // max(itemsize, 1))


def _vmem_capacity_bytes():
    try:
        info = pltpu.get_tpu_info()
        cap = getattr(info, "vmem_capacity_bytes", None)
        if cap:
            return int(cap)
    except Exception:
        pass
    return 64 << 20  # conservative fallback (v7x per-TensorCore VMEM)


def _per_row_vmem_bytes(hidden, in_b, out_b):
    # Double-buffered input + output tiles, plus ~2x f32 intermediates the
    # compiler keeps live across the mean reduction (x is reused for x*inv,
    # slack for x*x / scratch).
    return 2 * hidden * (in_b + out_b) + 2 * hidden * 4


def _pick_row_tile(num_rows, hidden, in_dtype, out_dtype):
    """Pick a moderate, sublane-aligned row tile; return 0 if H is too big."""
    sub = max(_sublane_multiple(in_dtype), _sublane_multiple(out_dtype))
    in_b = jnp.dtype(in_dtype).itemsize
    out_b = jnp.dtype(out_dtype).itemsize
    per_row = _per_row_vmem_bytes(hidden, in_b, out_b)

    # Budget against the tightest generation: never trust more than 64 MiB
    # (get_tpu_info may report per-chip capacity on multi-core chips such as
    # v7x, which has 64 MiB per TensorCore).  Use a third of it so the full
    # double-buffered working set + compiler scratch stays comfortably inside.
    vmem_cap = min(_vmem_capacity_bytes(), 64 << 20)
    budget = vmem_cap // 3

    tile = budget // max(per_row, 1)

    # Cap the per-buffered-input tile at ~4 MiB: tiles of this class already
    # sit at 85%+ of the HBM roofline; bigger tiles only lengthen pipeline
    # fill/drain (matters most on v5e's ~820 GB/s HBM).
    max_in_tile_bytes = 4 << 20
    tile = min(tile, max_in_tile_bytes // max(hidden * in_b, 1))

    tile = (tile // sub) * sub
    if tile < sub:
        return 0  # even `sub` rows of in+out+f32 temps overflow the budget

    # Keep the grid at >= ~8 steps when the row count allows it, so DMAs
    # double-buffer and both v7x TensorCores get several blocks each
    # (a 1-step grid serializes DMA-in / compute / DMA-out).
    min_grid = 8
    if num_rows >= min_grid * sub:
        tile = min(tile, (num_rows // min_grid // sub) * sub)
    tile = max(tile, sub)

    # Never bigger than needed to cover all rows (rounded up to the sublane).
    rows_aligned = pl.cdiv(num_rows, sub) * sub
    tile = min(tile, rows_aligned)
    return int(tile)


def llama_rmsnorm(hidden_states, weight, eps=1e-6, *, row_tile=None,
                  out_in_input_dtype=False):
    """RMSNorm over the last axis. hidden_states: (..., H); weight: (H,).

    out_in_input_dtype=True is strongly recommended for 16-bit activations:
    it writes the result in the activation dtype (halving HBM write traffic)
    instead of PyTorch's weight/activation promotion result.
    """
    orig_shape = hidden_states.shape
    H = orig_shape[-1]
    x2d = hidden_states.reshape(-1, H)
    R = x2d.shape[0]
    w2d = weight.reshape(1, H)

    if out_in_input_dtype:
        out_dtype = hidden_states.dtype
    else:
        # PyTorch: weight(f32) * hidden.to(input_dtype) -> promoted dtype.
        out_dtype = jnp.promote_types(weight.dtype, hidden_states.dtype)

    in_b = jnp.dtype(x2d.dtype).itemsize
    out_b = jnp.dtype(out_dtype).itemsize
    w_b = jnp.dtype(weight.dtype).itemsize
    sub = max(_sublane_multiple(x2d.dtype), _sublane_multiple(out_dtype))

    if row_tile is None:
        row_tile = _pick_row_tile(R, H, x2d.dtype, out_dtype)

    if row_tile == 0:
        # Extreme hidden size: even `sub` rows won't fit the VMEM budget.
        # TODO(synk): add a split-H two-pass Pallas reduction for this case.
        return llama_rmsnorm_ref(hidden_states, weight, eps).astype(out_dtype)

    assert row_tile % sub == 0, "row_tile must respect sublane packing"

    # Ragged grid: no host-side padding/slicing (those are extra full-tensor
    # HBM passes).  Pallas masks the out-of-bounds writes of the last block.
    grid = (pl.cdiv(R, row_tile),)

    # Scoped VMEM: enough for the double-buffered working set, clamped to
    # [32 MiB, 48 MiB] — above v5e's 16 MiB scoped default, safely below
    # v7x's 64 MiB physical per-TensorCore VMEM.
    needed = row_tile * _per_row_vmem_bytes(H, in_b, out_b) + 2 * H * w_b + (4 << 20)
    vmem_limit = int(max(32 << 20, min(48 << 20, needed)))

    kernel = functools.partial(_rmsnorm_kernel, eps=eps)

    cost = pl.CostEstimate(
        flops=3 * R * H,
        transcendentals=R,
        bytes_accessed=R * H * (in_b + out_b) + H * w_b,
    )

    out = pl.pallas_call(
        kernel,
        out_shape=jax.ShapeDtypeStruct((R, H), out_dtype),
        grid_spec=pltpu.PrefetchScalarGridSpec(
            num_scalar_prefetch=0,
            grid=grid,
            in_specs=[
                pl.BlockSpec((row_tile, H), lambda i: (i, 0)),
                pl.BlockSpec((1, H), lambda i: (0, 0)),  # constant block: not re-DMA'd
            ],
            out_specs=pl.BlockSpec((row_tile, H), lambda i: (i, 0)),
        ),
        compiler_params=pltpu.CompilerParams(
            dimension_semantics=("parallel",),
            vmem_limit_bytes=vmem_limit,
        ),
        cost_estimate=cost,
    )(x2d, w2d)

    return out.reshape(orig_shape[:-1] + (H,))


def llama_rmsnorm_ref(hidden_states, weight, eps=1e-6):
    """Pure-JAX reference mirroring the PyTorch forward."""
    input_dtype = hidden_states.dtype
    x = hidden_states.astype(jnp.float32)
    var = jnp.mean(x * x, axis=-1, keepdims=True)
    x = x * jax.lax.rsqrt(var + eps)
    return weight * x.astype(input_dtype)


if __name__ == "__main__":
    key = jax.random.PRNGKey(0)
    batch, seq, hidden = 2, 8, 128
    x = jax.random.normal(key, (batch, seq, hidden), dtype=jnp.float32)

    # Deterministic parameter init, matching nn.Parameter(torch.ones(hidden_size)).
    weight = jnp.ones((hidden,), dtype=jnp.float32)

    out = llama_rmsnorm(x, weight, eps=1e-6)
    out = jax.block_until_ready(out)

    ref = llama_rmsnorm_ref(x, weight, eps=1e-6)
    assert out.shape == ref.shape and out.dtype == ref.dtype
    assert jnp.allclose(out, ref, atol=1e-5, rtol=1e-5)

    # Ragged last block path (row count not a multiple of the tile).
    x_odd = jax.random.normal(key, (3, 5, hidden), dtype=jnp.float32)
    out_odd = jax.block_until_ready(llama_rmsnorm(x_odd, weight, eps=1e-6))
    ref_odd = llama_rmsnorm_ref(x_odd, weight, eps=1e-6)
    assert jnp.allclose(out_odd, ref_odd, atol=1e-5, rtol=1e-5)

    # Multi-step pipelined grid path (several blocks, exercises double-buffering).
    x_big = jax.random.normal(key, (4, 64, hidden), dtype=jnp.float32)
    out_big = jax.block_until_ready(llama_rmsnorm(x_big, weight, eps=1e-6))
    ref_big = llama_rmsnorm_ref(x_big, weight, eps=1e-6)
    assert jnp.allclose(out_big, ref_big, atol=1e-5, rtol=1e-5)

    print("KERNEL_OK")
</pallas_src>

<mosaic_0001>
module attributes {stable_mosaic.version = 11 : i64} {
  func.func @_rmsnorm_kernel(%arg0: i32, %arg1: memref<16x128xf32, #tpu.memory_space<vmem>>, %arg2: memref<1x128xf32, #tpu.memory_space<vmem>>, %arg3: memref<16x128xf32, #tpu.memory_space<vmem>>) attributes {dimension_semantics = [#tpu.dimension_semantics<parallel>], iteration_bounds = array<i64: 1>, scalar_prefetch = 0 : i64, scratch_operands = 0 : i64, tpu.core_type = #tpu.core_type<tc>, window_params = [{transform_indices = @transform_0, window_bounds = array<i64: 16, 128>}, {pipeline_mode = #tpu.pipeline_mode<synchronous>, transform_indices = @transform_1, window_bounds = array<i64: 1, 128>}, {transform_indices = @transform_2, window_bounds = array<i64: 16, 128>}]} {
    %c0 = arith.constant 0 : index
    %c0_0 = arith.constant 0 : index
    %0 = vector.load %arg1[%c0, %c0_0] : memref<16x128xf32, #tpu.memory_space<vmem>>, vector<16x128xf32>
    %1 = arith.mulf %0, %0 : vector<16x128xf32>
    %cst = arith.constant dense<0.000000e+00> : vector<16xf32>
    %2 = vector.multi_reduction <add>, %1, %cst [1] : vector<16x128xf32> to vector<16xf32>
    %3 = vector.shape_cast %2 : vector<16xf32> to vector<16x1xf32>
    %cst_1 = arith.constant 1.280000e+02 : f32
    %4 = vector.broadcast %cst_1 : f32 to vector<16x1xf32>
    %5 = arith.divf %3, %4 : vector<16x1xf32>
    %cst_2 = arith.constant 9.99999997E-7 : f32
    %6 = vector.broadcast %cst_2 : f32 to vector<16x1xf32>
    %7 = arith.addf %5, %6 : vector<16x1xf32>
    %8 = math.rsqrt %7 : vector<16x1xf32>
    %9 = vector.broadcast %8 : vector<16x1xf32> to vector<16x128xf32>
    %10 = arith.mulf %0, %9 : vector<16x128xf32>
    %c0_3 = arith.constant 0 : index
    %c0_4 = arith.constant 0 : index
    %11 = vector.load %arg2[%c0_3, %c0_4] : memref<1x128xf32, #tpu.memory_space<vmem>>, vector<1x128xf32>
    %12 = vector.broadcast %11 : vector<1x128xf32> to vector<16x128xf32>
    %13 = arith.mulf %12, %10 : vector<16x128xf32>
    %c0_5 = arith.constant 0 : index
    %c0_6 = arith.constant 0 : index
    %14 = vector.load %arg3[%c0_5, %c0_6] : memref<16x128xf32, #tpu.memory_space<vmem>>, vector<16x128xf32>
    tpu.vector_store %arg3[%c0_5, %c0_6], %13 {strides = array<i32>} : memref<16x128xf32, #tpu.memory_space<vmem>>, vector<16x128xf32>,
    return
  }
  func.func @transform_0(%arg0: i32) -> (i32, i32) {
    %c0_i32 = arith.constant 0 : i32
    %c0_i32_0 = arith.constant 0 : i32
    return %arg0, %c0_i32 : i32, i32
  }
  func.func @transform_1(%arg0: i32) -> (i32, i32) {
    %c0_i32 = arith.constant 0 : i32
    %c0_i32_0 = arith.constant 0 : i32
    %c0_i32_1 = arith.constant 0 : i32
    return %c0_i32, %c0_i32_0 : i32, i32
  }
  func.func @transform_2(%arg0: i32) -> (i32, i32) {
    %c0_i32 = arith.constant 0 : i32
    %c0_i32_0 = arith.constant 0 : i32
    return %arg0, %c0_i32 : i32, i32
  }
}

</mosaic_0001>

<llo_original>
// kernel: tpu_custom_call.1
$region0: #{tpu_custom_call.1}
  #allocation0 [shape = 'u32[]', space=smem, size = 0x4, offset = 0x4, fixed_abs, tag = 'smem constant byte address 0x4 - core index']
  #allocation1 [shape = 'u32[144,128]{1,0:T(1,128)}', space=vmem, size = 0x12000, scoped, tag = 'internal scratch']
  %s0 = inlined_call_operand.hbm [shape: f32[16,128], index: 0, kind: input, shape index: {}]
  %s1 = inlined_call_operand.vmem [shape: f32[1,128], index: 1, kind: input, shape index: {}]
  %s2 = inlined_call_operand.hbm [shape: f32[16,128], index: 2, kind: output, shape index: {}]
  %s3 = sld [smem:[#allocation0]]
  $region22: #{tpu_custom_call.1} parent=0
    _
  %s5 = ssub.s32 1, %s3
  %s6 = scalar_select 0, %s5, %s3
  $region1: #{tpu_custom_call.1} parent=0
    #allocation2 [shape = 'u8[8192]{0}', space=vmem, size = 0x2000, scoped, tag = 'input window, operand 0, single buffered']
    #allocation3 [shape = 's32[1]{0}', space=sflag, size = 0x4, scoped, tag = 'scoped memory for tpu_custom_call.1']
    #allocation4 [shape = 's32[1]{0}', space=sflag, size = 0x4, scoped, tag = 'scoped memory for tpu_custom_call.1']
    #allocation5 [shape = 'u8[8192]{0}', space=vmem, size = 0x2000, scoped, tag = 'output window, operand 0, single buffered']
    %7 = vsyncpa [#allocation3], 0
    %8 = vsyncpa [#allocation4], 0
    // Predicated region
    $region2: #{tpu_custom_call.1} parent=1 // pred_check
      _
    $region3: #{tpu_custom_call.1} parent=1 // pred_check_branch
      %10 = sbr.rel (0) target = $region5
    $region4: #{tpu_custom_call.1} parent=1 // pred_region
      %s12 = ssub.s32 256, 256
      %13 = vsyncadd [#allocation3], %s12
      %s14 = sshll.u32 [#allocation2], 4
      %s15 = int_to_ptr.vmem [resolvable:$true] %s14
      %20 = dma.hbm_to_vmem [thread:$0]  %s0, 256, %s15, [#allocation3], 128, 128, 8
    $region5: #{tpu_custom_call.1} parent=1 // pred_fallthru
      _
    // Predicated region
    $region6: #{tpu_custom_call.1} parent=1 // pred_check
      _
    $region7: #{tpu_custom_call.1} parent=1 // pred_check_branch
      %22 = sbr.rel (0) target = $region9
    $region8: #{tpu_custom_call.1} parent=1 // pred_region
      _
    $region9: #{tpu_custom_call.1} parent=1 // pred_fallthru
      _
    // Predicated region
    $region10: #{tpu_custom_call.1} parent=1 // pred_check
      _
    $region11: #{tpu_custom_call.1} parent=1 // pred_check_branch
      %24 = sbr.rel (0) target = $region13
    $region12: #{tpu_custom_call.1} parent=1 // pred_region
      %25 = dma.done [#allocation3], 256
    $region13: #{tpu_custom_call.1} parent=1 // pred_fallthru
      _
    %v26 = vld [vmem:[#allocation2] sm:$0xff]
    %v27 = vld [vmem:[#allocation2 + $0x8] sm:$0xff]
    %v28 = vmul.f32 %v26, %v26
    %v29 = vmul.f32 %v27, %v27
    %30 = vadd.xlane.f32.xlu0 %v28
    %v31 = vpop.xlane.xlu0 %30
    %32 = vadd.xlane.f32.xlu0 %v29
    %v33 = vpop.xlane.xlu0 %32
    %v34 = vrcp.pop 128.0
    %v35 = vmul.f32 %v31, %v34
    %v36 = vmul.f32 %v33, %v34
    %v37 = vadd.f32 %v35, 1e-06
    %v38 = vadd.f32 %v36, 1e-06
    %v39 = vrsqrt.pop %v37
    %v40 = vrsqrt.pop %v38
    %v41 = vmul.f32 %v26, %v39
    %v42 = vmul.f32 %v27, %v40
    %v43 = vld [vmem:[%s1] sm:$0x1]
    %v45 = vlaneseq
    %v46 = vshrl.u32 %v45, 7
    %v47 = vsub.s32 0, %v46
    %v48 = vrot.slane %v43, %v47
    %v50 = vmul.f32 %v48, %v41
    %v51 = vmul.f32 %v48, %v42
    %52 = vst [vmem:[#allocation5] sm:$0xff] %v50
    %53 = vst [vmem:[#allocation5 + $0x8] sm:$0xff] %v51
    // Predicated region
    $region14: #{tpu_custom_call.1} parent=1 // pred_check
      _
    $region15: #{tpu_custom_call.1} parent=1 // pred_check_branch
      %55 = sbr.rel (0) target = $region17
    $region16: #{tpu_custom_call.1} parent=1 // pred_region
      %s57 = ssub.s32 256, 256
      %58 = vsyncadd [#allocation4], %s57
      %s59 = sshll.u32 [#allocation5], 4
      %s60 = int_to_ptr.vmem [resolvable:$true] %s59
      %65 = dma.vmem_to_hbm [thread:$0]  %s60, 256, %s2, [#allocation4], 128, 128, 8
    $region17: #{tpu_custom_call.1} parent=1 // pred_fallthru
      _
    // Predicated region
    $region18: #{tpu_custom_call.1} parent=1 // pred_check
      _
    $region19: #{tpu_custom_call.1} parent=1 // pred_check_branch
      %67 = sbr.rel (0) target = $region21
    $region20: #{tpu_custom_call.1} parent=1 // pred_region
      %68 = dma.done [#allocation4], 256
    $region21: #{tpu_custom_call.1} parent=1 // pred_fallthru
      _
    %69 = vsyncpa [#allocation3], 1
    %70 = vsyncpa [#allocation4], 1

</llo_original>
